<compile_context>
chip_gen: v5e
topology: v5e:2x2
jax: 0.10.0
libtpu: 0.0.40
codegen_flags: <defaults>
</compile_context>

<pallas_src>
import jax
import jax.numpy as jnp
from jax.experimental import pallas as pl
from jax.experimental.pallas import tpu as pltpu


def _round_up(x, m):
    return ((x + m - 1) // m) * m


def _sublane_multiple(dtype):
    # f32 -> 8, bf16 -> 16, int8/fp8 -> 32 (sub-32-bit dtypes pack along sublanes).
    return max(8, 32 // jnp.dtype(dtype).itemsize)


def _linear_kernel_f32(x_ref, w_ref, b_ref, o_ref):
    # float32 output: accumulate directly into the (resident) output block.
    k = pl.program_id(2)

    @pl.when(k == 0)
    def _():
        o_ref[...] = jnp.broadcast_to(b_ref[...].astype(o_ref.dtype), o_ref.shape)

    o_ref[...] += jnp.dot(x_ref[...], w_ref[...], preferred_element_type=jnp.float32)


def _linear_kernel_acc(x_ref, w_ref, b_ref, o_ref, acc_ref):
    # Narrow output dtypes: f32 VMEM accumulator, cast on the last K step.
    k = pl.program_id(2)

    @pl.when(k == 0)
    def _():
        acc_ref[...] = jnp.broadcast_to(b_ref[...].astype(jnp.float32), acc_ref.shape)

    acc_ref[...] += jnp.dot(x_ref[...], w_ref[...], preferred_element_type=jnp.float32)

    @pl.when(k == pl.num_programs(2) - 1)
    def _():
        o_ref[...] = acc_ref[...].astype(o_ref.dtype)


def make_poincare_ball_linear(weight, bias=None, *,
                              block_m=512, block_n=512, block_k=512,
                              resident_weight_bytes=4 << 20):
    """One-time parameter prep (pad + transpose). Returns a jitted apply(x).

    Equivalent of SinglePoincareBallLinear.forward on TPU (= F.linear).
    """
    N, K = weight.shape
    if bias is None:
        bias = jnp.zeros((N,), weight.dtype)
    itemsize = jnp.dtype(weight.dtype).itemsize

    # Balanced N/K tiles (multiples of 128), derived once from the layer dims.
    nt = pl.cdiv(N, max(int(block_n), 128))
    bn = _round_up(pl.cdiv(N, nt), 128)
    kt = pl.cdiv(K, max(int(block_k), 128))
    bk = _round_up(pl.cdiv(K, kt), 128)
    Np, Kp = bn * nt, bk * kt

    # Resident-weight fast path: if the whole padded weight (and the matching
    # x / out tiles) comfortably fits VMEM, keep it un-tiled so it is fetched
    # from HBM exactly once for the whole call.
    if (Np * Kp * itemsize <= resident_weight_bytes
            and block_m * Kp * itemsize <= resident_weight_bytes
            and block_m * Np * itemsize <= resident_weight_bytes):
        bn, bk = Np, Kp

    # One-time parameter prep (hoisted out of the per-call hot path):
    # weight (N, K) -> padded (Kp, Np), bias -> padded (1, Np).
    w_kn = jnp.pad(weight.T, ((0, Kp - K), (0, Np - N)))
    b_row = jnp.pad(bias, (0, Np - N)).reshape(1, Np)

    def _apply(x):
        B, K_in = x.shape
        assert K_in == K, "in_features mismatch"
        out_dtype = x.dtype

        # Balanced M tile (multiple of the dtype's sublane packing).
        sm = _sublane_multiple(x.dtype)
        mt = pl.cdiv(B, max(int(block_m), sm))
        bm = _round_up(pl.cdiv(B, mt), sm)
        Bp = bm * mt

        x_p = x
        if (Bp, Kp) != (B, K):
            x_p = jnp.pad(x, ((0, Bp - B), (0, Kp - K)))

        grid = (Bp // bm, Np // bn, Kp // bk)

        # Padded dims + re-stream factors (x re-read per N tile, weight per M tile).
        cost = pl.CostEstimate(
            flops=2 * Bp * Kp * Np,
            transcendentals=0,
            bytes_accessed=itemsize * (Bp * Kp * grid[1] + Kp * Np * grid[0]
                                       + Bp * Np + Np),
        )

        if out_dtype == jnp.float32:
            kernel = _linear_kernel_f32
            scratch = []
        else:
            kernel = _linear_kernel_acc
            scratch = [pltpu.VMEM((bm, bn), jnp.float32)]

        out = pl.pallas_call(
            kernel,
            out_shape=jax.ShapeDtypeStruct((Bp, Np), out_dtype),
            grid_spec=pltpu.PrefetchScalarGridSpec(
                num_scalar_prefetch=0,
                grid=grid,
                in_specs=[
                    pl.BlockSpec((bm, bk), lambda i, j, k: (i, k)),   # x tile
                    pl.BlockSpec((bk, bn), lambda i, j, k: (k, j)),   # weight tile (K,N layout)
                    pl.BlockSpec((1, bn), lambda i, j, k: (0, j)),    # bias tile
                ],
                out_specs=pl.BlockSpec((bm, bn), lambda i, j, k: (i, j)),
                scratch_shapes=scratch,
            ),
            compiler_params=pltpu.CompilerParams(
                dimension_semantics=("parallel", "parallel", "arbitrary"),
            ),
            cost_estimate=cost,
        )(x_p, w_kn, b_row)

        if (Bp, Np) != (B, N):
            out = out[:B, :N]
        return out

    return jax.jit(_apply)


# TODO(synk): the CUDA-only `rs.poincare_ball_forward_cuda` fused branch
# (tanh renormalization + Mobius-style blend) is never reached on non-CUDA
# devices in the reference module, so it is intentionally not implemented.


if __name__ == "__main__":
    key = jax.random.PRNGKey(0)
    k_w, k_x, k_w2, k_x2, k_b2 = jax.random.split(key, 5)

    # --- Test 1: module-like small shapes (resident-weight, single grid step) ---
    batch, in_features, out_features = 16, 32, 32
    weight = jax.random.normal(k_w, (out_features, in_features), jnp.float32) * 0.1
    bias = jnp.zeros((out_features,), jnp.float32)
    x = jax.random.normal(k_x, (batch, in_features), jnp.float32)

    layer = make_poincare_ball_linear(weight, bias)
    out = jax.block_until_ready(layer(x))
    ref = x @ weight.T + bias
    assert out.shape == (batch, out_features)
    assert jnp.allclose(out, ref, atol=1e-4, rtol=1e-5)

    # --- Test 2: unaligned shapes exercising the tiled N/K grid + accumulation ---
    B2, K2, N2 = 24, 200, 300
    w2 = jax.random.normal(k_w2, (N2, K2), jnp.float32) * 0.1
    b2 = jax.random.normal(k_b2, (N2,), jnp.float32) * 0.1
    x2 = jax.random.normal(k_x2, (B2, K2), jnp.float32)

    layer2 = make_poincare_ball_linear(w2, b2, block_m=128, block_n=256, block_k=128,
                                       resident_weight_bytes=0)  # force N/K tiling
    out2 = jax.block_until_ready(layer2(x2))
    ref2 = x2 @ w2.T + b2
    assert out2.shape == (B2, N2)
    assert jnp.allclose(out2, ref2, atol=1e-4, rtol=1e-5)

    # --- Test 3: bf16 path (f32 VMEM accumulator kernel variant) ---
    xb = x.astype(jnp.bfloat16)
    layer3 = make_poincare_ball_linear(weight.astype(jnp.bfloat16),
                                       bias.astype(jnp.bfloat16))
    out3 = jax.block_until_ready(layer3(xb))
    ref3 = xb.astype(jnp.float32) @ weight.T + bias
    assert out3.shape == (batch, out_features)
    assert jnp.allclose(out3.astype(jnp.float32), ref3, atol=5e-2)

    print("KERNEL_OK")
</pallas_src>

<mosaic_0001>
module attributes {stable_mosaic.version = 11 : i64} {
  func.func @_linear_kernel_f32(%arg0: i32, %arg1: i32, %arg2: i32, %arg3: memref<16x128xf32, #tpu.memory_space<vmem>>, %arg4: memref<128x128xf32, #tpu.memory_space<vmem>>, %arg5: memref<1x128xf32, #tpu.memory_space<vmem>>, %arg6: memref<16x128xf32, #tpu.memory_space<vmem>>) attributes {dimension_semantics = [#tpu.dimension_semantics<parallel>, #tpu.dimension_semantics<parallel>, #tpu.dimension_semantics<arbitrary>], iteration_bounds = array<i64: 1, 1, 1>, scalar_prefetch = 0 : i64, scratch_operands = 0 : i64, tpu.core_type = #tpu.core_type<tc>, window_params = [{transform_indices = @transform_0, window_bounds = array<i64: 16, 128>}, {transform_indices = @transform_1, window_bounds = array<i64: 128, 128>}, {transform_indices = @transform_2, window_bounds = array<i64: 1, 128>}, {transform_indices = @transform_3, window_bounds = array<i64: 16, 128>}]} {
    %c0_i32 = arith.constant 0 : i32
    %0 = arith.cmpi eq, %arg2, %c0_i32 : i32
    %1 = arith.extui %0 : i1 to i32
    %c0_i32_0 = arith.constant 0 : i32
    %2 = arith.cmpi ne, %1, %c0_i32_0 : i32
    scf.if %2 {
      %c0_8 = arith.constant 0 : index
      %c0_9 = arith.constant 0 : index
      %9 = vector.load %arg5[%c0_8, %c0_9] : memref<1x128xf32, #tpu.memory_space<vmem>>, vector<1x128xf32>
      %10 = vector.shape_cast %9 : vector<1x128xf32> to vector<1x128xf32>
      %11 = vector.broadcast %10 : vector<1x128xf32> to vector<16x128xf32>
      %c0_10 = arith.constant 0 : index
      %c0_11 = arith.constant 0 : index
      %12 = vector.load %arg6[%c0_10, %c0_11] : memref<16x128xf32, #tpu.memory_space<vmem>>, vector<16x128xf32>
      tpu.vector_store %arg6[%c0_10, %c0_11], %11 {strides = array<i32>} : memref<16x128xf32, #tpu.memory_space<vmem>>, vector<16x128xf32>,
    } else {
    }
    %c0 = arith.constant 0 : index
    %c0_1 = arith.constant 0 : index
    %3 = vector.load %arg6[%c0, %c0_1] : memref<16x128xf32, #tpu.memory_space<vmem>>, vector<16x128xf32>
    %c0_2 = arith.constant 0 : index
    %c0_3 = arith.constant 0 : index
    %4 = vector.load %arg3[%c0_2, %c0_3] : memref<16x128xf32, #tpu.memory_space<vmem>>, vector<16x128xf32>
    %c0_4 = arith.constant 0 : index
    %c0_5 = arith.constant 0 : index
    %5 = vector.load %arg4[%c0_4, %c0_5] : memref<128x128xf32, #tpu.memory_space<vmem>>, vector<128x128xf32>
    %cst = arith.constant dense<0.000000e+00> : vector<16x128xf32>
    %6 = tpu.matmul %4, %5, %cst {dimension_numbers = #tpu.dot_dimension_numbers<[1], [0], [0], [1], [0, 0, 1, 1], [], []>} : vector<16x128xf32>, vector<128x128xf32>, vector<16x128xf32> -> vector<16x128xf32>
    %7 = arith.addf %3, %6 : vector<16x128xf32>
    %c0_6 = arith.constant 0 : index
    %c0_7 = arith.constant 0 : index
    %8 = vector.load %arg6[%c0_6, %c0_7] : memref<16x128xf32, #tpu.memory_space<vmem>>, vector<16x128xf32>
    tpu.vector_store %arg6[%c0_6, %c0_7], %7 {strides = array<i32>} : memref<16x128xf32, #tpu.memory_space<vmem>>, vector<16x128xf32>,
    return
  }
  func.func @transform_0(%arg0: i32, %arg1: i32, %arg2: i32) -> (i32, i32) {
    %c0_i32 = arith.constant 0 : i32
    return %arg0, %arg2 : i32, i32
  }
  func.func @transform_1(%arg0: i32, %arg1: i32, %arg2: i32) -> (i32, i32) {
    %c0_i32 = arith.constant 0 : i32
    return %arg2, %arg1 : i32, i32
  }
  func.func @transform_2(%arg0: i32, %arg1: i32, %arg2: i32) -> (i32, i32) {
    %c0_i32 = arith.constant 0 : i32
    %c0_i32_0 = arith.constant 0 : i32
    return %c0_i32, %arg1 : i32, i32
  }
  func.func @transform_3(%arg0: i32, %arg1: i32, %arg2: i32) -> (i32, i32) {
    %c0_i32 = arith.constant 0 : i32
    return %arg0, %arg1 : i32, i32
  }
}

</mosaic_0001>

<llo_original>
// kernel: _apply.1
$region0: #{_apply.1}
  #allocation0 [shape = 'u32[]', space=smem, size = 0x4, offset = 0x4, fixed_abs, tag = 'smem constant byte address 0x4 - core index']
  #allocation1 [shape = 'u32[72,128]{1,0:T(1,128)}', space=vmem, size = 0x9000, scoped, tag = 'internal scratch']
  %s0 = inlined_call_operand.vmem [shape: f32[16,128], index: 0, kind: input, shape index: {}]
  %s1 = inlined_call_operand.hbm [shape: f32[128,128], index: 1, kind: input, shape index: {}]
  %s2 = inlined_call_operand.vmem [shape: f32[1,128], index: 2, kind: input, shape index: {}]
  %s3 = inlined_call_operand.hbm [shape: f32[16,128], index: 3, kind: output, shape index: {}]
  %s4 = sld [smem:[#allocation0]]
  $region30: #{_apply.1} parent=0
    _
  %s6 = ssub.s32 1, %s4
  %s7 = scalar_select 0, %s6, %s4
  $region1: #{_apply.1} parent=0
    #allocation2 [shape = 'u8[65536]{0}', space=vmem, size = 0x10000, scoped, tag = 'input window, operand 1, single buffered']
    #allocation3 [shape = 's32[1]{0}', space=sflag, size = 0x4, scoped, tag = 'scoped memory for _apply.1']
    #allocation4 [shape = 's32[1]{0}', space=sflag, size = 0x4, scoped, tag = 'scoped memory for _apply.1']
    #allocation5 [shape = 'u8[8192]{0}', space=vmem, size = 0x2000, scoped, tag = 'output window, operand 0, single buffered']
    %8 = vsyncpa [#allocation3], 0
    %9 = vsyncpa [#allocation4], 0
    // Predicated region
    $region2: #{_apply.1} parent=1 // pred_check
      _
    $region3: #{_apply.1} parent=1 // pred_check_branch
      %11 = sbr.rel (0) target = $region5
    $region4: #{_apply.1} parent=1 // pred_region
      _
    $region5: #{_apply.1} parent=1 // pred_fallthru
      _
    // Predicated region
    $region6: #{_apply.1} parent=1 // pred_check
      _
    $region7: #{_apply.1} parent=1 // pred_check_branch
      %13 = sbr.rel (0) target = $region9
    $region8: #{_apply.1} parent=1 // pred_region
      %15 = vsyncadd [#allocation3], 0
      %s16 = sshll.u32 %s1, 4
      %s17 = int_to_ptr.hbm [resolvable:$true] %s16
      %s18 = sshll.u32 [#allocation2], 4
      %s19 = int_to_ptr.vmem [resolvable:$true] %s18
      %24 = dma.hbm_to_vmem [thread:$0]  %s17, 2048, %s19, [#allocation3], 128, 128, 8
    $region9: #{_apply.1} parent=1 // pred_fallthru
      _
    // Predicated region
    $region10: #{_apply.1} parent=1 // pred_check
      _
    $region11: #{_apply.1} parent=1 // pred_check_branch
      %26 = sbr.rel (0) target = $region13
    $region12: #{_apply.1} parent=1 // pred_region
      _
    $region13: #{_apply.1} parent=1 // pred_fallthru
      _
    // Predicated region
    $region14: #{_apply.1} parent=1 // pred_check
      _
    $region15: #{_apply.1} parent=1 // pred_check_branch
      %28 = sbr.rel (0) target = $region17
    $region16: #{_apply.1} parent=1 // pred_region
      %30 = dma.done [#allocation3], 2048
    $region17: #{_apply.1} parent=1 // pred_fallthru
      _
    %p31 = scmp.eq.s32.totalorder 0, 0
    // Predicated region
    $region18: #{_apply.1} parent=1 // pred_check
      %p32 = pneg %p31
    $region19: #{_apply.1} parent=1 // pred_check_branch
      %34 = sbr.rel (%p32) target = $region21
    $region20: #{_apply.1} parent=1 // pred_region
      %v35 = vld [vmem:[%s2] sm:$0x1]
      %v37 = vperm.slane %v35, 0
      %39 = vst [vmem:[#allocation5] sm:$0xff] %v37
      %40 = vst [vmem:[#allocation5 + $0x8] sm:$0xff] %v37
    $region21: #{_apply.1} parent=1 // pred_fallthru
      _
    %v41 = vld [vmem:[#allocation5] sm:$0xff]
    %v42 = vld [vmem:[#allocation5 + $0x8] sm:$0xff]
    %v43 = vld [vmem:[%s0] sm:$0xff]
    %v44 = vld [vmem:[%s0 + $0x8] sm:$0xff]
    %v45 = vld [vmem:[#allocation2] sm:$0xff]
    %v46 = vld [vmem:[#allocation2 + $0x8] sm:$0xff]
    %v47 = vld [vmem:[#allocation2 + $0x10] sm:$0xff]
    %v48 = vld [vmem:[#allocation2 + $0x18] sm:$0xff]
    %v49 = vld [vmem:[#allocation2 + $0x20] sm:$0xff]
    %v50 = vld [vmem:[#allocation2 + $0x28] sm:$0xff]
    %v51 = vld [vmem:[#allocation2 + $0x30] sm:$0xff]
    %v52 = vld [vmem:[#allocation2 + $0x38] sm:$0xff]
    %v53 = vld [vmem:[#allocation2 + $0x40] sm:$0xff]
    %v54 = vld [vmem:[#allocation2 + $0x48] sm:$0xff]
    %v55 = vld [vmem:[#allocation2 + $0x50] sm:$0xff]
    %v56 = vld [vmem:[#allocation2 + $0x58] sm:$0xff]
    %v57 = vld [vmem:[#allocation2 + $0x60] sm:$0xff]
    %v58 = vld [vmem:[#allocation2 + $0x68] sm:$0xff]
    %v59 = vld [vmem:[#allocation2 + $0x70] sm:$0xff]
    %v60 = vld [vmem:[#allocation2 + $0x78] sm:$0xff]
    %61 = vmatpush.msra.mxu0 %v60
    %62 = vmatpush.msra.mxu0 %v59
    %63 = vmatpush.msra.mxu0 %v58
    %64 = vmatpush.msra.mxu0 %v57
    %65 = vmatpush.msra.mxu0 %v56
    %66 = vmatpush.msra.mxu0 %v55
    %67 = vmatpush.msra.mxu0 %v54
    %68 = vmatpush.msra.mxu0 %v53
    %69 = vmatpush.msra.mxu0 %v52
    %70 = vmatpush.msra.mxu0 %v51
    %71 = vmatpush.msra.mxu0 %v50
    %72 = vmatpush.msra.mxu0 %v49
    %73 = vmatpush.msra.mxu0 %v48
    %74 = vmatpush.msra.mxu0 %v47
    %75 = vmatpush.msra.mxu0 %v46
    %76 = vmatpush.msra.mxu0 %v45
    %77 = vmatmul.f32.gmra.mxu0 %v43
    %v78 = vpop.f32.mrf.mxu0
    %v79 = vadd.f32 0.0, %v78
    %80 = vmatmul.f32.gmra.mxu0 %v44
    %v81 = vpop.f32.mrf.mxu0
    %v82 = vadd.f32 0.0, %v81
    %83 = vdwg.mxu0
    %v84 = vadd.f32 %v41, %v79
    %v85 = vadd.f32 %v42, %v82
    %86 = vst [vmem:[#allocation5] sm:$0xff] %v84
    %87 = vst [vmem:[#allocation5 + $0x8] sm:$0xff] %v85
    // Predicated region
    $region22: #{_apply.1} parent=1 // pred_check
      _
    $region23: #{_apply.1} parent=1 // pred_check_branch
      %89 = sbr.rel (0) target = $region25
    $region24: #{_apply.1} parent=1 // pred_region
      %91 = vsyncadd [#allocation4], 0
      %s92 = sshll.u32 [#allocation5], 4
      %s93 = int_to_ptr.vmem [resolvable:$true] %s92
      %s94 = sshll.u32 %s3, 4
      %s95 = int_to_ptr.hbm [resolvable:$true] %s94
      %100 = dma.vmem_to_hbm [thread:$0]  %s93, 256, %s95, [#allocation4], 128, 128, 8
    $region25: #{_apply.1} parent=1 // pred_fallthru
      _
    // Predicated region
    $region26: #{_apply.1} parent=1 // pred_check
      _
    $region27: #{_apply.1} parent=1 // pred_check_branch
      %102 = sbr.rel (0) target = $region29
    $region28: #{_apply.1} parent=1 // pred_region
      %104 = dma.done [#allocation4], 256
    $region29: #{_apply.1} parent=1 // pred_fallthru
      _
    %105 = vsyncpa [#allocation3], 1
    %106 = vsyncpa [#allocation4], 1

</llo_original>
